<compile_context>
chip_gen: v6e
topology: v6e:2x2x1
jax: 0.10.0
libtpu: 0.0.40
codegen_flags: <defaults>
</compile_context>

<pallas_src>
import jax
import jax.numpy as jnp
from jax import lax
from jax.experimental import pallas as pl
from jax.experimental.pallas import tpu as pltpu


def mlp_kernel(x_ref, w1_ref, b1_ref, w2_ref, b2_ref, o_ref):
    """fc1 -> sigmoid -> fc2 for one batch tile.

    x_ref:  (TB, D)  input rows (f32 or bf16)
    w1_ref: (D, 8)   fc1 weight, stored (in, out)
    b1_ref: (1, 8)   fc1 bias (f32)
    w2_ref: (4, 8)   fc2 weight, torch-native (out, in)
    b2_ref: (4, 1)   fc2 bias (f32)
    o_ref:  (4, TB)  output, transposed so batch sits on the 128-lane axis
    """
    # fc1 on the MXU with f32 accumulation; bias + sigmoid in f32 (v5e-safe).
    h = jnp.dot(x_ref[...], w1_ref[...], preferred_element_type=jnp.float32)
    h = jax.nn.sigmoid(h + b1_ref[...])                      # (TB, 8), f32

    # fc2 as w2 @ h.T via a last-dim contraction so the (4, TB) result is
    # lane-dense on the batch axis -> unmasked stores to the output block.
    y_t = lax.dot_general(
        w2_ref[...], h,
        dimension_numbers=(((1,), (1,)), ((), ())),
        preferred_element_type=jnp.float32,
    )                                                        # (4, TB), f32
    o_ref[...] = (y_t + b2_ref[...]).astype(o_ref.dtype)


def net_forward(x, w1, b1, w2, b2, *, block_rows=4096, out_dtype=jnp.float32):
    """Equivalent of Net.forward: sigmoid(x @ w1 + b1) @ w2.T + b2 -> (B, 4)."""
    B, D = x.shape
    H = w1.shape[1]   # 8
    O = w2.shape[0]   # 4

    # Batch tile must be a multiple of 128 (lane axis of the transposed output
    # block). Sweep 2048-8192 on v5e/v6e; the default is conservative enough
    # for v7x's smaller VMEM.
    block_rows = max(128, (block_rows // 128) * 128)
    tb = min(block_rows, pl.cdiv(B, 128) * 128)
    num_blocks = pl.cdiv(B, tb)
    bp = num_blocks * tb
    if bp != B:
        x = jnp.pad(x, ((0, bp - B), (0, 0)))   # ragged last tile -> zero pad

    b1 = jnp.asarray(b1, jnp.float32).reshape(1, H)
    b2 = jnp.asarray(b2, jnp.float32).reshape(O, 1)

    out_t = pl.pallas_call(
        mlp_kernel,
        out_shape=jax.ShapeDtypeStruct((O, bp), out_dtype),
        grid=(num_blocks,),
        in_specs=[
            # x streams one batch tile per grid step.
            # If DMA latency shows exposed, add pipeline_mode=pl.Buffered(3).
            pl.BlockSpec((tb, D), lambda i: (i, 0)),
            # Weights/biases: constant index_map -> fetched once, VMEM-resident.
            pl.BlockSpec((D, H), lambda i: (0, 0)),
            pl.BlockSpec((1, H), lambda i: (0, 0)),
            pl.BlockSpec((O, H), lambda i: (0, 0)),
            pl.BlockSpec((O, 1), lambda i: (0, 0)),
        ],
        out_specs=pl.BlockSpec((O, tb), lambda i: (0, i)),
        compiler_params=pltpu.CompilerParams(
            dimension_semantics=("parallel",),  # batch tiles are independent
        ),
    )(x, w1, b1, w2, b2)

    # Un-transpose (tiny: 4 x B elements) and drop padding rows.
    return out_t[:, :B].T


def init_params(key, input_shape):
    """torch.nn.Linear-style init: U(-1/sqrt(fan_in), 1/sqrt(fan_in))."""
    k1, k2, k3, k4 = jax.random.split(key, 4)
    bound1 = 1.0 / jnp.sqrt(float(input_shape))
    w1 = jax.random.uniform(k1, (input_shape, 8), jnp.float32, -bound1, bound1)
    b1 = jax.random.uniform(k2, (1, 8), jnp.float32, -bound1, bound1)
    bound2 = 1.0 / jnp.sqrt(8.0)
    w2 = jax.random.uniform(k3, (4, 8), jnp.float32, -bound2, bound2)  # (out, in)
    b2 = jax.random.uniform(k4, (4, 1), jnp.float32, -bound2, bound2)
    return w1, b1, w2, b2


def reference(x, w1, b1, w2, b2):
    h = jax.nn.sigmoid(jnp.dot(x, w1) + b1.reshape(1, -1))
    return jnp.dot(h, w2.T) + b2.reshape(1, -1)


if __name__ == "__main__":
    key = jax.random.PRNGKey(0)
    key_x, key_p, key_big = jax.random.split(key, 3)

    input_shape = 32
    w1, b1, w2, b2 = init_params(key_p, input_shape)

    # --- small-shape check (batch=2), f32 path ------------------------------
    x_small = jax.random.normal(key_x, (2, input_shape), dtype=jnp.float32)
    out_small = net_forward(x_small, w1, b1, w2, b2)
    jax.block_until_ready(out_small)
    ref_small = reference(x_small, w1, b1, w2, b2)
    assert out_small.shape == (2, 4)
    assert jnp.allclose(out_small, ref_small, atol=1e-5, rtol=1e-5)

    # --- multi-block grid + ragged batch (exercises padding, weight residency,
    #     parallel grid) ------------------------------------------------------
    x_big = jax.random.normal(key_big, (1000, input_shape), dtype=jnp.float32)
    out_big = net_forward(x_big, w1, b1, w2, b2, block_rows=256)
    jax.block_until_ready(out_big)
    ref_big = reference(x_big, w1, b1, w2, b2)
    assert out_big.shape == (1000, 4)
    assert jnp.allclose(out_big, ref_big, atol=1e-5, rtol=1e-5)

    # --- bf16 input path: halves the x HBM read; f32 accumulate + f32 sigmoid
    #     so it is also valid on v5e ------------------------------------------
    x_bf = x_big.astype(jnp.bfloat16)
    w1_bf = w1.astype(jnp.bfloat16)
    out_bf = net_forward(x_bf, w1_bf, b1, w2, b2, block_rows=256)
    jax.block_until_ready(out_bf)
    ref_bf = reference(x_bf.astype(jnp.float32), w1_bf.astype(jnp.float32),
                       b1, w2, b2)
    assert jnp.allclose(out_bf, ref_bf, atol=1e-4, rtol=1e-3)

    print("KERNEL_OK")
</pallas_src>

<mosaic_0001>
module attributes {stable_mosaic.version = 11 : i64} {
  func.func @mlp_kernel(%arg0: i32, %arg1: memref<128x32xf32, #tpu.memory_space<vmem>>, %arg2: memref<32x8xf32, #tpu.memory_space<vmem>>, %arg3: memref<1x8xf32, #tpu.memory_space<vmem>>, %arg4: memref<4x8xf32, #tpu.memory_space<vmem>>, %arg5: memref<4x1xf32, #tpu.memory_space<vmem>>, %arg6: memref<4x128xf32, #tpu.memory_space<vmem>>) attributes {dimension_semantics = [#tpu.dimension_semantics<parallel>], iteration_bounds = array<i64: 1>, scalar_prefetch = 0 : i64, scratch_operands = 0 : i64, tpu.core_type = #tpu.core_type<tc>, window_params = [{transform_indices = @transform_0, window_bounds = array<i64: 128, 32>}, {pipeline_mode = #tpu.pipeline_mode<synchronous>, transform_indices = @transform_1, window_bounds = array<i64: 32, 8>}, {pipeline_mode = #tpu.pipeline_mode<synchronous>, transform_indices = @transform_2, window_bounds = array<i64: 1, 8>}, {pipeline_mode = #tpu.pipeline_mode<synchronous>, transform_indices = @transform_3, window_bounds = array<i64: 4, 8>}, {pipeline_mode = #tpu.pipeline_mode<synchronous>, transform_indices = @transform_4, window_bounds = array<i64: 4, 1>}, {transform_indices = @transform_5, window_bounds = array<i64: 4, 128>}]} {
    %c0 = arith.constant 0 : index
    %c0_0 = arith.constant 0 : index
    %0 = vector.load %arg1[%c0, %c0_0] : memref<128x32xf32, #tpu.memory_space<vmem>>, vector<128x32xf32>
    %c0_1 = arith.constant 0 : index
    %c0_2 = arith.constant 0 : index
    %1 = vector.load %arg2[%c0_1, %c0_2] : memref<32x8xf32, #tpu.memory_space<vmem>>, vector<32x8xf32>
    %cst = arith.constant dense<0.000000e+00> : vector<128x8xf32>
    %2 = tpu.matmul %0, %1, %cst {dimension_numbers = #tpu.dot_dimension_numbers<[1], [0], [0], [1], [0, 0, 1, 1], [], []>} : vector<128x32xf32>, vector<32x8xf32>, vector<128x8xf32> -> vector<128x8xf32>
    %c0_3 = arith.constant 0 : index
    %c0_4 = arith.constant 0 : index
    %3 = vector.load %arg3[%c0_3, %c0_4] : memref<1x8xf32, #tpu.memory_space<vmem>>, vector<1x8xf32>
    %4 = vector.broadcast %3 : vector<1x8xf32> to vector<128x8xf32>
    %5 = arith.addf %2, %4 : vector<128x8xf32>
    %6 = arith.negf %5 : vector<128x8xf32>
    %7 = math.exp %6 : vector<128x8xf32>
    %cst_5 = arith.constant 1.000000e+00 : f32
    %8 = vector.broadcast %cst_5 : f32 to vector<128x8xf32>
    %9 = arith.addf %8, %7 : vector<128x8xf32>
    %10 = arith.divf %8, %9 : vector<128x8xf32>
    %c0_6 = arith.constant 0 : index
    %c0_7 = arith.constant 0 : index
    %11 = vector.load %arg4[%c0_6, %c0_7] : memref<4x8xf32, #tpu.memory_space<vmem>>, vector<4x8xf32>
    %cst_8 = arith.constant dense<0.000000e+00> : vector<4x128xf32>
    %12 = tpu.matmul %11, %10, %cst_8 {dimension_numbers = #tpu.dot_dimension_numbers<[1], [1], [0], [0], [0, 0, 1, 0], [], []>} : vector<4x8xf32>, vector<128x8xf32>, vector<4x128xf32> -> vector<4x128xf32>
    %c0_9 = arith.constant 0 : index
    %c0_10 = arith.constant 0 : index
    %13 = vector.load %arg5[%c0_9, %c0_10] : memref<4x1xf32, #tpu.memory_space<vmem>>, vector<4x1xf32>
    %14 = vector.broadcast %13 : vector<4x1xf32> to vector<4x128xf32>
    %15 = arith.addf %12, %14 : vector<4x128xf32>
    %c0_11 = arith.constant 0 : index
    %c0_12 = arith.constant 0 : index
    %16 = vector.load %arg6[%c0_11, %c0_12] : memref<4x128xf32, #tpu.memory_space<vmem>>, vector<4x128xf32>
    tpu.vector_store %arg6[%c0_11, %c0_12], %15 {strides = array<i32>} : memref<4x128xf32, #tpu.memory_space<vmem>>, vector<4x128xf32>,
    return
  }
  func.func @transform_0(%arg0: i32) -> (i32, i32) {
    %c0_i32 = arith.constant 0 : i32
    %c0_i32_0 = arith.constant 0 : i32
    return %arg0, %c0_i32 : i32, i32
  }
  func.func @transform_1(%arg0: i32) -> (i32, i32) {
    %c0_i32 = arith.constant 0 : i32
    %c0_i32_0 = arith.constant 0 : i32
    %c0_i32_1 = arith.constant 0 : i32
    return %c0_i32, %c0_i32_0 : i32, i32
  }
  func.func @transform_2(%arg0: i32) -> (i32, i32) {
    %c0_i32 = arith.constant 0 : i32
    %c0_i32_0 = arith.constant 0 : i32
    %c0_i32_1 = arith.constant 0 : i32
    return %c0_i32, %c0_i32_0 : i32, i32
  }
  func.func @transform_3(%arg0: i32) -> (i32, i32) {
    %c0_i32 = arith.constant 0 : i32
    %c0_i32_0 = arith.constant 0 : i32
    %c0_i32_1 = arith.constant 0 : i32
    return %c0_i32, %c0_i32_0 : i32, i32
  }
  func.func @transform_4(%arg0: i32) -> (i32, i32) {
    %c0_i32 = arith.constant 0 : i32
    %c0_i32_0 = arith.constant 0 : i32
    %c0_i32_1 = arith.constant 0 : i32
    return %c0_i32, %c0_i32_0 : i32, i32
  }
  func.func @transform_5(%arg0: i32) -> (i32, i32) {
    %c0_i32 = arith.constant 0 : i32
    %c0_i32_0 = arith.constant 0 : i32
    return %c0_i32, %arg0 : i32, i32
  }
}

</mosaic_0001>

<llo_original>
// kernel: tpu_custom_call.1
$region0: #{tpu_custom_call.1}
  #allocation0 [shape = 'u32[]', space=smem, size = 0x4, offset = 0x4, fixed_abs, tag = 'smem constant byte address 0x4 - core index']
  #allocation1 [shape = 'u32[144,128]{1,0:T(1,128)}', space=vmem, size = 0x12000, scoped, tag = 'internal scratch']
  %s0 = inlined_call_operand.vmem [shape: f32[128,32], index: 0, kind: input, shape index: {}]
  %s1 = inlined_call_operand.vmem [shape: f32[32,8], index: 1, kind: input, shape index: {}]
  %s2 = inlined_call_operand.vmem [shape: f32[1,8], index: 2, kind: input, shape index: {}]
  %s3 = inlined_call_operand.vmem [shape: f32[4,8], index: 3, kind: input, shape index: {}]
  %s4 = inlined_call_operand.vmem [shape: f32[4,1], index: 4, kind: input, shape index: {}]
  %s5 = inlined_call_operand.hbm [shape: f32[4,128], index: 5, kind: output, shape index: {}]
  %s6 = sld [smem:[#allocation0]]
  $region30: #{tpu_custom_call.1} parent=0
    _
  %s8 = ssub.s32 1, %s6
  %s9 = scalar_select 0, %s8, %s6
  $region1: #{tpu_custom_call.1} parent=0
    #allocation2 [shape = 'u8[2048]{0}', space=vmem, size = 0x800, scoped, tag = 'output window, operand 0, single buffered']
    #allocation3 [shape = 's32[1]{0}', space=sflag, size = 0x4, scoped, tag = 'scoped memory for tpu_custom_call.1']
    %10 = vsyncpa [#allocation3], 0
    // Predicated region
    $region2: #{tpu_custom_call.1} parent=1 // pred_check
      _
    $region3: #{tpu_custom_call.1} parent=1 // pred_check_branch
      %12 = sbr.rel (0) target = $region5
    $region4: #{tpu_custom_call.1} parent=1 // pred_region
      _
    $region5: #{tpu_custom_call.1} parent=1 // pred_fallthru
      _
    // Predicated region
    $region6: #{tpu_custom_call.1} parent=1 // pred_check
      _
    $region7: #{tpu_custom_call.1} parent=1 // pred_check_branch
      %14 = sbr.rel (0) target = $region9
    $region8: #{tpu_custom_call.1} parent=1 // pred_region
      _
    $region9: #{tpu_custom_call.1} parent=1 // pred_fallthru
      _
    // Predicated region
    $region10: #{tpu_custom_call.1} parent=1 // pred_check
      _
    $region11: #{tpu_custom_call.1} parent=1 // pred_check_branch
      %16 = sbr.rel (0) target = $region13
    $region12: #{tpu_custom_call.1} parent=1 // pred_region
      _
    $region13: #{tpu_custom_call.1} parent=1 // pred_fallthru
      _
    // Predicated region
    $region14: #{tpu_custom_call.1} parent=1 // pred_check
      _
    $region15: #{tpu_custom_call.1} parent=1 // pred_check_branch
      %18 = sbr.rel (0) target = $region17
    $region16: #{tpu_custom_call.1} parent=1 // pred_region
      _
    $region17: #{tpu_custom_call.1} parent=1 // pred_fallthru
      _
    // Predicated region
    $region18: #{tpu_custom_call.1} parent=1 // pred_check
      _
    $region19: #{tpu_custom_call.1} parent=1 // pred_check_branch
      %20 = sbr.rel (0) target = $region21
    $region20: #{tpu_custom_call.1} parent=1 // pred_region
      _
    $region21: #{tpu_custom_call.1} parent=1 // pred_fallthru
      _
    %v21 = vld [vmem:[%s0] sm:$0xff]
    %v22 = vld [vmem:[%s0 + $0x8] sm:$0xff]
    %v23 = vld [vmem:[%s0 + $0x10] sm:$0xff]
    %v24 = vld [vmem:[%s0 + $0x18] sm:$0xff]
    %v25 = vld [vmem:[%s0 + $0x20] sm:$0xff]
    %v26 = vld [vmem:[%s0 + $0x28] sm:$0xff]
    %v27 = vld [vmem:[%s0 + $0x30] sm:$0xff]
    %v28 = vld [vmem:[%s0 + $0x38] sm:$0xff]
    %v29 = vld [vmem:[%s0 + $0x40] sm:$0xff]
    %v30 = vld [vmem:[%s0 + $0x48] sm:$0xff]
    %v31 = vld [vmem:[%s0 + $0x50] sm:$0xff]
    %v32 = vld [vmem:[%s0 + $0x58] sm:$0xff]
    %v33 = vld [vmem:[%s0 + $0x60] sm:$0xff]
    %v34 = vld [vmem:[%s0 + $0x68] sm:$0xff]
    %v35 = vld [vmem:[%s0 + $0x70] sm:$0xff]
    %v36 = vld [vmem:[%s0 + $0x78] sm:$0xff]
    %v37 = vld [vmem:[%s1] sm:$0xff]
    %v38 = vld [vmem:[%s1 + $0x8] sm:$0xff]
    %v39 = vld [vmem:[%s1 + $0x10] sm:$0xff]
    %v40 = vld [vmem:[%s1 + $0x18] sm:$0xff]
    %v41 = vld [vmem:[%s2] sm:$0x1]
    %v43 = vlaneseq
    %v44 = vshrl.u32 %v43, 7
    %v45 = vsub.s32 0, %v44
    %v46 = vrot.slane %v41, %v45
    %vm48 = vcmask 261120
    %v50 = vsel %vm48, %v21, 0
    %v53 = vsel %vm48, %v22, 0
    %v56 = vsel %vm48, %v23, 0
    %v59 = vsel %vm48, %v24, 0
    %v62 = vsel %vm48, %v25, 0
    %v65 = vsel %vm48, %v26, 0
    %v68 = vsel %vm48, %v27, 0
    %v71 = vsel %vm48, %v28, 0
    %v74 = vsel %vm48, %v29, 0
    %v77 = vsel %vm48, %v30, 0
    %v80 = vsel %vm48, %v31, 0
    %v83 = vsel %vm48, %v32, 0
    %v86 = vsel %vm48, %v33, 0
    %v89 = vsel %vm48, %v34, 0
    %v92 = vsel %vm48, %v35, 0
    %v95 = vsel %vm48, %v36, 0
    %97 = vmatprep.subr.mxu0 0.0
    %98 = vmatpush1.msra.mxu0 0.0
    %99 = vmatprep.subr.mxu0 0.0
    %100 = vmatpush1.msra.mxu0 0.0
    %101 = vmatprep.subr.mxu0 0.0
    %102 = vmatpush1.msra.mxu0 0.0
    %103 = vmatprep.subr.mxu0 0.0
    %104 = vmatpush1.msra.mxu0 0.0
    %105 = vmatprep.subr.mxu0 0.0
    %106 = vmatpush1.msra.mxu0 0.0
    %107 = vmatprep.subr.mxu0 0.0
    %108 = vmatpush1.msra.mxu0 0.0
    %109 = vmatprep.subr.mxu0 0.0
    %110 = vmatpush1.msra.mxu0 0.0
    %111 = vmatprep.subr.mxu0 0.0
    %112 = vmatpush1.msra.mxu0 0.0
    %113 = vmatprep.subr.mxu0 0.0
    %114 = vmatpush1.msra.mxu0 0.0
    %115 = vmatprep.subr.mxu0 0.0
    %116 = vmatpush1.msra.mxu0 0.0
    %117 = vmatprep.subr.mxu0 0.0
    %118 = vmatpush1.msra.mxu0 0.0
    %119 = vmatprep.subr.mxu0 0.0
    %120 = vmatpush1.msra.mxu0 0.0
    %121 = vmatprep.subr.mxu0 0.0
    %122 = vmatpush1.msra.mxu0 %v40
    %123 = vmatprep.subr.mxu0 0.0
    %124 = vmatpush1.msra.mxu0 %v39
    %125 = vmatprep.subr.mxu0 0.0
    %126 = vmatpush1.msra.mxu0 %v38
    %127 = vmatprep.subr.mxu0 0.0
    %128 = vmatpush1.msra.mxu0 %v37
    %129 = vmatprep.subr.mxu0 0.0
    %130 = vmatpush2.msra.mxu0 0.0
    %131 = vmatprep.subr.mxu0 0.0
    %132 = vmatpush2.msra.mxu0 0.0
    %133 = vmatprep.subr.mxu0 0.0
    %134 = vmatpush2.msra.mxu0 0.0
    %135 = vmatprep.subr.mxu0 0.0
    %136 = vmatpush2.msra.mxu0 0.0
    %137 = vmatprep.subr.mxu0 0.0
    %138 = vmatpush2.msra.mxu0 0.0
    %139 = vmatprep.subr.mxu0 0.0
    %140 = vmatpush2.msra.mxu0 0.0
    %141 = vmatprep.subr.mxu0 0.0
    %142 = vmatpush2.msra.mxu0 0.0
    %143 = vmatprep.subr.mxu0 0.0
    %144 = vmatpush2.msra.mxu0 0.0
    %145 = vmatprep.subr.mxu0 0.0
    %146 = vmatpush2.msra.mxu0 0.0
    %147 = vmatprep.subr.mxu0 0.0
    %148 = vmatpush2.msra.mxu0 0.0
    %149 = vmatprep.subr.mxu0 0.0
    %150 = vmatpush2.msra.mxu0 0.0
    %151 = vmatprep.subr.mxu0 0.0
    %152 = vmatpush2.msra.mxu0 0.0
    %153 = vmatprep.subr.mxu0 0.0
    %154 = vmatpush2.msra.mxu0 0.0
    %155 = vmatprep.subr.mxu0 0.0
    %156 = vmatpush2.msra.mxu0 0.0
    %157 = vmatprep.subr.mxu0 0.0
    %158 = vmatpush2.msra.mxu0 0.0
    %159 = vmatprep.subr.mxu0 0.0
    %160 = vmatpush2.msra.mxu0 0.0
    %161 = vmatprep.mubr.f32.mxu0 0.0
    %162 = vmatmul.mubr.f32.gmra.mxu0 %v50
    %v163 = vpop.f32.mrf.mxu0
    %v164 = vadd.f32 %v46, %v163
    %v165 = vpop.f32.mrf.mxu0
    %166 = vmatprep.mubr.f32.mxu0 0.0
    %167 = vmatmul.mubr.f32.gmra.mxu0 %v53
    %v168 = vpop.f32.mrf.mxu0
    %v169 = vadd.f32 %v46, %v168
    %v170 = vpop.f32.mrf.mxu0
    %171 = vmatprep.mubr.f32.mxu0 0.0
    %172 = vmatmul.mubr.f32.gmra.mxu0 %v56
    %v173 = vpop.f32.mrf.mxu0
    %v174 = vadd.f32 %v46, %v173
    %v175 = vpop.f32.mrf.mxu0
    %176 = vmatprep.mubr.f32.mxu0 0.0
    %177 = vmatmul.mubr.f32.gmra.mxu0 %v59
    %v178 = vpop.f32.mrf.mxu0
    %v179 = vadd.f32 %v46, %v178
    %v180 = vpop.f32.mrf.mxu0
    %181 = vmatprep.mubr.f32.mxu0 0.0
    %182 = vmatmul.mubr.f32.gmra.mxu0 %v62
    %v183 = vpop.f32.mrf.mxu0
    %v184 = vadd.f32 %v46, %v183
    %v185 = vpop.f32.mrf.mxu0
    %186 = vmatprep.mubr.f32.mxu0 0.0
    %187 = vmatmul.mubr.f32.gmra.mxu0 %v65
    %v188 = vpop.f32.mrf.mxu0
    %v189 = vadd.f32 %v46, %v188
    %v190 = vpop.f32.mrf.mxu0
    %191 = vmatprep.mubr.f32.mxu0 0.0
    %192 = vmatmul.mubr.f32.gmra.mxu0 %v68
    %v193 = vpop.f32.mrf.mxu0
    %v194 = vadd.f32 %v46, %v193
    %v195 = vpop.f32.mrf.mxu0
    %196 = vmatprep.mubr.f32.mxu0 0.0
    %197 = vmatmul.mubr.f32.gmra.mxu0 %v71
    %v198 = vpop.f32.mrf.mxu0
    %v199 = vadd.f32 %v46, %v198
    %v200 = vpop.f32.mrf.mxu0
    %201 = vmatprep.mubr.f32.mxu0 0.0
    %202 = vmatmul.mubr.f32.gmra.mxu0 %v74
    %v203 = vpop.f32.mrf.mxu0
    %v204 = vadd.f32 %v46, %v203
    %v205 = vpop.f32.mrf.mxu0
    %206 = vmatprep.mubr.f32.mxu0 0.0
    %207 = vmatmul.mubr.f32.gmra.mxu0 %v77
    %v208 = vpop.f32.mrf.mxu0
    %v209 = vadd.f32 %v46, %v208
    %v210 = vpop.f32.mrf.mxu0
    %211 = vmatprep.mubr.f32.mxu0 0.0
    %212 = vmatmul.mubr.f32.gmra.mxu0 %v80
    %v213 = vpop.f32.mrf.mxu0
    %v214 = vadd.f32 %v46, %v213
    %v215 = vpop.f32.mrf.mxu0
    %216 = vmatprep.mubr.f32.mxu0 0.0
    %217 = vmatmul.mubr.f32.gmra.mxu0 %v83
    %v218 = vpop.f32.mrf.mxu0
    %v219 = vadd.f32 %v46, %v218
    %v220 = vpop.f32.mrf.mxu0
    %221 = vmatprep.mubr.f32.mxu0 0.0
    %222 = vmatmul.mubr.f32.gmra.mxu0 %v86
    %v223 = vpop.f32.mrf.mxu0
    %v224 = vadd.f32 %v46, %v223
    %v225 = vpop.f32.mrf.mxu0
    %226 = vmatprep.mubr.f32.mxu0 0.0
    %227 = vmatmul.mubr.f32.gmra.mxu0 %v89
    %v228 = vpop.f32.mrf.mxu0
    %v229 = vadd.f32 %v46, %v228
    %v230 = vpop.f32.mrf.mxu0
    %231 = vmatprep.mubr.f32.mxu0 0.0
    %232 = vmatmul.mubr.f32.gmra.mxu0 %v92
    %v233 = vpop.f32.mrf.mxu0
    %v234 = vadd.f32 %v46, %v233
    %v235 = vpop.f32.mrf.mxu0
    %236 = vmatprep.mubr.f32.mxu0 0.0
    %237 = vmatmul.mubr.f32.gmra.mxu0 %v95
    %v238 = vpop.f32.mrf.mxu0
    %v239 = vadd.f32 %v46, %v238
    %v240 = vpop.f32.mrf.mxu0
    %241 = vdwg.mxu0
    %v242 = vxor.u32 %v164, 2147483648
    %v243 = vxor.u32 %v169, 2147483648
    %v244 = vxor.u32 %v174, 2147483648
    %v245 = vxor.u32 %v179, 2147483648
    %v246 = vxor.u32 %v184, 2147483648
    %v247 = vxor.u32 %v189, 2147483648
    %v248 = vxor.u32 %v194, 2147483648
    %v249 = vxor.u32 %v199, 2147483648
    %v250 = vxor.u32 %v204, 2147483648
    %v251 = vxor.u32 %v209, 2147483648
    %v252 = vxor.u32 %v214, 2147483648
    %v253 = vxor.u32 %v219, 2147483648
    %v254 = vxor.u32 %v224, 2147483648
    %v255 = vxor.u32 %v229, 2147483648
    %v256 = vxor.u32 %v234, 2147483648
    %v257 = vxor.u32 %v239, 2147483648
    %v258 = vmul.f32 %v242, 1.442695
    %v259 = vpow.pop %v258
    %v260 = vmul.f32 %v243, 1.442695
    %v261 = vpow.pop %v260
    %v262 = vmul.f32 %v244, 1.442695
    %v263 = vpow.pop %v262
    %v264 = vmul.f32 %v245, 1.442695
    %v265 = vpow.pop %v264
    %v266 = vmul.f32 %v246, 1.442695
    %v267 = vpow.pop %v266
    %v268 = vmul.f32 %v247, 1.442695
    %v269 = vpow.pop %v268
    %v270 = vmul.f32 %v248, 1.442695
    %v271 = vpow.pop %v270
    %v272 = vmul.f32 %v249, 1.442695
    %v273 = vpow.pop %v272
    %v274 = vmul.f32 %v250, 1.442695
    %v275 = vpow.pop %v274
    %v276 = vmul.f32 %v251, 1.442695
    %v277 = vpow.pop %v276
    %v278 = vmul.f32 %v252, 1.442695
    %v279 = vpow.pop %v278
    %v280 = vmul.f32 %v253, 1.442695
    %v281 = vpow.pop %v280
    %v282 = vmul.f32 %v254, 1.442695
    %v283 = vpow.pop %v282
    %v284 = vmul.f32 %v255, 1.442695
    %v285 = vpow.pop %v284
    %v286 = vmul.f32 %v256, 1.442695
    %v287 = vpow.pop %v286
    %v288 = vmul.f32 %v257, 1.442695
    %v289 = vpow.pop %v288
    %v290 = vadd.f32 %v259, 1.0
    %v291 = vadd.f32 %v261, 1.0
    %v292 = vadd.f32 %v263, 1.0
    %v293 = vadd.f32 %v265, 1.0
    %v294 = vadd.f32 %v267, 1.0
    %v295 = vadd.f32 %v269, 1.0
    %v296 = vadd.f32 %v271, 1.0
    %v297 = vadd.f32 %v273, 1.0
    %v298 = vadd.f32 %v275, 1.0
    %v299 = vadd.f32 %v277, 1.0
    %v300 = vadd.f32 %v279, 1.0
    %v301 = vadd.f32 %v281, 1.0
    %v302 = vadd.f32 %v283, 1.0
    %v303 = vadd.f32 %v285, 1.0
    %v304 = vadd.f32 %v287, 1.0
    %v305 = vadd.f32 %v289, 1.0
    %v306 = vrcp.pop %v290
    %v307 = vmul.f32 1.0, %v306
    %v308 = vrcp.pop %v291
    %v309 = vmul.f32 1.0, %v308
    %v310 = vrcp.pop %v292
    %v311 = vmul.f32 1.0, %v310
    %v312 = vrcp.pop %v293
    %v313 = vmul.f32 1.0, %v312
    %v314 = vrcp.pop %v294
    %v315 = vmul.f32 1.0, %v314
    %v316 = vrcp.pop %v295
    %v317 = vmul.f32 1.0, %v316
    %v318 = vrcp.pop %v296
    %v319 = vmul.f32 1.0, %v318
    %v320 = vrcp.pop %v297
    %v321 = vmul.f32 1.0, %v320
    %v322 = vrcp.pop %v298
    %v323 = vmul.f32 1.0, %v322
    %v324 = vrcp.pop %v299
    %v325 = vmul.f32 1.0, %v324
    %v326 = vrcp.pop %v300
    %v327 = vmul.f32 1.0, %v326
    %v328 = vrcp.pop %v301
    %v329 = vmul.f32 1.0, %v328
    %v330 = vrcp.pop %v302
    %v331 = vmul.f32 1.0, %v330
    %v332 = vrcp.pop %v303
    %v333 = vmul.f32 1.0, %v332
    %v334 = vrcp.pop %v304
    %v335 = vmul.f32 1.0, %v334
    %v336 = vrcp.pop %v305
    %v337 = vmul.f32 1.0, %v336
    %v338 = vld [vmem:[%s3] sm:$0xf]
    %v339 = vld [vmem:[%s4] sm:$0xf]
    %341 = vset.pattern.permute.xlu0 0
    %342 = vperm.xlu0 %341, %v339
    %v343 = vpop.permute.xlu0 %342
    %vm345 = vcmask 64512
    %v347 = vsel %vm345, %v338, 0
    %v350 = vsel %vm345, %v307, 0
    %v353 = vsel %vm345, %v309, 0
    %v356 = vsel %vm345, %v311, 0
    %v359 = vsel %vm345, %v313, 0
    %v362 = vsel %vm345, %v315, 0
    %v365 = vsel %vm345, %v317, 0
    %v368 = vsel %vm345, %v319, 0
    %v371 = vsel %vm345, %v321, 0
    %v374 = vsel %vm345, %v323, 0
    %v377 = vsel %vm345, %v325, 0
    %v380 = vsel %vm345, %v327, 0
    %v383 = vsel %vm345, %v329, 0
    %v386 = vsel %vm345, %v331, 0
    %v389 = vsel %vm345, %v333, 0
    %v392 = vsel %vm345, %v335, 0
    %v395 = vsel %vm345, %v337, 0
    %397 = vmatprep.subr.mxu0 0.0
    %398 = vmatpush1.xpose.msra.mxu0 %v395
    %399 = vmatprep.subr.mxu0 0.0
    %400 = vmatpush1.xpose.msra.mxu0 %v392
    %401 = vmatprep.subr.mxu0 0.0
    %402 = vmatpush1.xpose.msra.mxu0 %v389
    %403 = vmatprep.subr.mxu0 0.0
    %404 = vmatpush1.xpose.msra.mxu0 %v386
    %405 = vmatprep.subr.mxu0 0.0
    %406 = vmatpush1.xpose.msra.mxu0 %v383
    %407 = vmatprep.subr.mxu0 0.0
    %408 = vmatpush1.xpose.msra.mxu0 %v380
    %409 = vmatprep.subr.mxu0 0.0
    %410 = vmatpush1.xpose.msra.mxu0 %v377
    %411 = vmatprep.subr.mxu0 0.0
    %412 = vmatpush1.xpose.msra.mxu0 %v374
    %413 = vmatprep.subr.mxu0 0.0
    %414 = vmatpush1.xpose.msra.mxu0 %v371
    %415 = vmatprep.subr.mxu0 0.0
    %416 = vmatpush1.xpose.msra.mxu0 %v368
    %417 = vmatprep.subr.mxu0 0.0
    %418 = vmatpush1.xpose.msra.mxu0 %v365
    %419 = vmatprep.subr.mxu0 0.0
    %420 = vmatpush1.xpose.msra.mxu0 %v362
    %421 = vmatprep.subr.mxu0 0.0
    %422 = vmatpush1.xpose.msra.mxu0 %v359
    %423 = vmatprep.subr.mxu0 0.0
    %424 = vmatpush1.xpose.msra.mxu0 %v356
    %425 = vmatprep.subr.mxu0 0.0
    %426 = vmatpush1.xpose.msra.mxu0 %v353
    %427 = vmatprep.subr.mxu0 0.0
    %428 = vmatpush1.xpose.msra.mxu0 %v350
    %429 = vmatprep.subr.mxu0 0.0
    %430 = vmatpush2.xpose.msra.mxu0 0.0
    %431 = vmatprep.subr.mxu0 0.0
    %432 = vmatpush2.xpose.msra.mxu0 0.0
    %433 = vmatprep.subr.mxu0 0.0
    %434 = vmatpush2.xpose.msra.mxu0 0.0
    %435 = vmatprep.subr.mxu0 0.0
    %436 = vmatpush2.xpose.msra.mxu0 0.0
    %437 = vmatprep.subr.mxu0 0.0
    %438 = vmatpush2.xpose.msra.mxu0 0.0
    %439 = vmatprep.subr.mxu0 0.0
    %440 = vmatpush2.xpose.msra.mxu0 0.0
    %441 = vmatprep.subr.mxu0 0.0
    %442 = vmatpush2.xpose.msra.mxu0 0.0
    %443 = vmatprep.subr.mxu0 0.0
    %444 = vmatpush2.xpose.msra.mxu0 0.0
    %445 = vmatprep.subr.mxu0 0.0
    %446 = vmatpush2.xpose.msra.mxu0 0.0
    %447 = vmatprep.subr.mxu0 0.0
    %448 = vmatpush2.xpose.msra.mxu0 0.0
    %449 = vmatprep.subr.mxu0 0.0
    %450 = vmatpush2.xpose.msra.mxu0 0.0
    %451 = vmatprep.subr.mxu0 0.0
    %452 = vmatpush2.xpose.msra.mxu0 0.0
    %453 = vmatprep.subr.mxu0 0.0
    %454 = vmatpush2.xpose.msra.mxu0 0.0
    %455 = vmatprep.subr.mxu0 0.0
    %456 = vmatpush2.xpose.msra.mxu0 0.0
    %457 = vmatprep.subr.mxu0 0.0
    %458 = vmatpush2.xpose.msra.mxu0 0.0
    %459 = vmatprep.subr.mxu0 0.0
    %460 = vmatpush2.xpose.msra.mxu0 0.0
    %461 = vmatprep.mubr.f32.mxu0 0.0
    %462 = vmatmul.mubr.f32.gmra.mxu0 %v347
    %v463 = vpop.f32.mrf.mxu0
    %v464 = vadd.f32 %v343, %v463
    %v465 = vpop.f32.mrf.mxu0
    %466 = vdwg.mxu0
    %467 = vst [vmem:[#allocation2] sm:$0xf] %v464
    // Predicated region
    $region22: #{tpu_custom_call.1} parent=1 // pred_check
      _
    $region23: #{tpu_custom_call.1} parent=1 // pred_check_branch
      %469 = sbr.rel (0) target = $region25
    $region24: #{tpu_custom_call.1} parent=1 // pred_region
      %s471 = ssub.s32 64, 64
      %472 = vsyncadd [#allocation3], %s471
      %s474 = sshll.u32 [#allocation2], 4
      %s475 = int_to_ptr.vmem [resolvable:$true] %s474
      %477 = dma.vmem_to_hbm [thread:$0]  %s475, 64, %s5, [#allocation3]
    $region25: #{tpu_custom_call.1} parent=1 // pred_fallthru
      _
    // Predicated region
    $region26: #{tpu_custom_call.1} parent=1 // pred_check
      _
    $region27: #{tpu_custom_call.1} parent=1 // pred_check_branch
      %479 = sbr.rel (0) target = $region29
    $region28: #{tpu_custom_call.1} parent=1 // pred_region
      %480 = dma.done [#allocation3], 64
    $region29: #{tpu_custom_call.1} parent=1 // pred_fallthru
      _
    %481 = vsyncpa [#allocation3], 1

</llo_original>
